<compile_context>
chip_gen: v7x
topology: tpu7x:2x2x1
jax: 0.10.0
libtpu: 0.0.40
codegen_flags: <defaults>
</compile_context>

<pallas_src>
import functools
import math

import jax
import jax.numpy as jnp
import numpy as np
from jax.experimental import pallas as pl
from jax.experimental.pallas import tpu as pltpu

EMBED = 200      # fixed by Conv2d kernel width (1, 200)
FC1_OUT = 512
LANE = 128
SUBLANE = 8
VMEM_BUDGET = 40 << 20   # target for the kernel's VMEM footprint (fits v7x 64 MiB)


def _round_up(n, m):
    return (n + m - 1) // m * m


def _cdiv(a, b):
    return -(-a // b)


def identity_kernel(x_ref, cw_ref, cb_ref,
                    w1_ref, b1_ref, w2_ref, b2_ref, w3_ref, b3_ref,
                    o_ref):
    x = x_ref[...]                                   # (bt, S, E) f32
    cb = cb_ref[0, 0]                                # scalar conv bias (SMEM)

    # conv1: (1, E) weight broadcasts against (bt, S, E); reduce E, add bias, ReLU.
    h = jnp.sum(x * cw_ref[...], axis=-1) + cb       # (bt, S)
    h = jnp.maximum(h, 0.0)

    # fc1 + ReLU   (dropout p=0.0 -> identity)
    y = jnp.dot(h, w1_ref[...], preferred_element_type=jnp.float32) + b1_ref[...]
    y = jnp.maximum(y, 0.0)                          # (bt, 512)

    # fc2 + ReLU   (lane-padded to h_pad; padded lanes stay exactly zero)
    y = jnp.dot(y, w2_ref[...], preferred_element_type=jnp.float32) + b2_ref[...]
    y = jnp.maximum(y, 0.0)                          # (bt, h_pad)

    # fc3 (lane-padded to out_pad -> unmasked, lane-dense store)
    o_ref[...] = (jnp.dot(y, w3_ref[...], preferred_element_type=jnp.float32)
                  + b3_ref[...])                     # (bt, out_pad)


def _vmem_bytes(bt, S, E, h_pad, out_pad):
    """VMEM footprint using real (lane/sublane padded) buffer sizes."""
    lane_e = _round_up(E, LANE)                       # x lane-pads 200 -> 256
    x_buf = bt * S * lane_e * 4
    out_buf = bt * out_pad * 4
    w_buf = (SUBLANE * lane_e                         # cw
             + _round_up(S, SUBLANE) * FC1_OUT        # w1
             + SUBLANE * FC1_OUT                      # b1
             + FC1_OUT * h_pad + SUBLANE * h_pad      # w2, b2
             + _round_up(h_pad, SUBLANE) * out_pad    # w3
             + SUBLANE * out_pad) * 4                 # b3
    # Double-buffered pipeline buffers + in-body intermediates (x*cw, fc1/fc2 acts).
    interm = x_buf + bt * FC1_OUT * 4 + bt * h_pad * 4
    return 2 * (x_buf + out_buf + w_buf) + interm


def prepare_params(params):
    """One-time parameter prep (hoisted out of the per-call jitted forward):
    zero-pad fc2 / fc3 to lane-dense (multiple-of-128) widths.  Padded activation
    columns are relu(0 + 0) = 0 and padded w3 rows are zero, so the result is
    numerically identical to the unpadded model."""
    h_dim = params["w2"].shape[1]
    out_dim = params["w3"].shape[1]
    h_pad = _round_up(h_dim, LANE)
    out_pad = _round_up(out_dim, LANE)
    prep = dict(params)
    prep["w2"] = jnp.pad(params["w2"], ((0, 0), (0, h_pad - h_dim)))
    prep["b2"] = jnp.pad(params["b2"], ((0, 0), (0, h_pad - h_dim)))
    prep["w3"] = jnp.pad(params["w3"], ((0, h_pad - h_dim), (0, out_pad - out_dim)))
    prep["b3"] = jnp.pad(params["b3"], ((0, 0), (0, out_pad - out_dim)))
    return prep, out_dim


@functools.partial(jax.jit, static_argnames=("out_dim", "block_b"))
def identity_forward(x, prep, *, out_dim, block_b=1024):
    B, S, E = x.shape
    h_pad = prep["w2"].shape[1]
    out_pad = prep["w3"].shape[1]

    # Batch tile: multiple of 8.  Cap at ~ceil(B/4) so the grid has >=4 steps
    # whenever possible (keeps both v7x TensorCores busy and the x pipeline warm),
    # then shrink until the true VMEM footprint fits the budget.
    cap = max(SUBLANE, _round_up(_cdiv(B, 4), SUBLANE))
    bt = max(SUBLANE, (min(block_b, cap) // SUBLANE) * SUBLANE)
    while bt > SUBLANE and _vmem_bytes(bt, S, E, h_pad, out_pad) > VMEM_BUDGET:
        bt = max(SUBLANE, _round_up(bt // 2, SUBLANE))

    # No batch padding: the trailing partial block's extra rows are garbage on
    # read and masked on store; every batch row is independent, so this is safe.
    grid = (_cdiv(B, bt),)

    vmem_limit = min(_vmem_bytes(bt, S, E, h_pad, out_pad) + (8 << 20), 60 << 20)

    weight_bytes = 4 * (E + 1 + S * FC1_OUT + FC1_OUT
                        + FC1_OUT * h_pad + h_pad
                        + h_pad * out_pad + out_pad)
    cost = pl.CostEstimate(
        flops=2 * B * (S * E + S * FC1_OUT + FC1_OUT * h_pad + h_pad * out_pad),
        transcendentals=0,
        bytes_accessed=B * S * E * 4 + B * out_pad * 4 + weight_bytes)

    out = pl.pallas_call(
        identity_kernel,
        out_shape=jax.ShapeDtypeStruct((B, out_pad), jnp.float32),
        grid=grid,
        in_specs=[
            # x: tiled over batch -> double-buffered HBM->VMEM pipeline.
            pl.BlockSpec((bt, S, E), lambda i: (i, 0, 0)),
            # Weights / biases: constant index_map -> VMEM-resident, no re-DMA.
            pl.BlockSpec((1, E), lambda i: (0, 0)),                # cw
            pl.BlockSpec(memory_space=pltpu.MemorySpace.SMEM),     # cb (scalar)
            pl.BlockSpec((S, FC1_OUT), lambda i: (0, 0)),          # w1
            pl.BlockSpec((1, FC1_OUT), lambda i: (0, 0)),          # b1
            pl.BlockSpec((FC1_OUT, h_pad), lambda i: (0, 0)),      # w2 (padded)
            pl.BlockSpec((1, h_pad), lambda i: (0, 0)),            # b2 (padded)
            pl.BlockSpec((h_pad, out_pad), lambda i: (0, 0)),      # w3 (padded)
            pl.BlockSpec((1, out_pad), lambda i: (0, 0)),          # b3 (padded)
        ],
        out_specs=pl.BlockSpec((bt, out_pad), lambda i: (i, 0)),
        compiler_params=pltpu.CompilerParams(
            dimension_semantics=("parallel",),       # shard batch grid across TCs
            vmem_limit_bytes=vmem_limit),
        cost_estimate=cost,
    )(x, prep["cw"], prep["cb"], prep["w1"], prep["b1"],
      prep["w2"], prep["b2"], prep["w3"], prep["b3"])

    return out[:, :out_dim]


def init_params(key, seq_len, h_dim=100, out_dim=10):
    """Deterministic PyTorch-style (uniform +-1/sqrt(fan_in)) init."""
    ks = jax.random.split(key, 8)

    def u(k, shape, fan_in):
        bound = 1.0 / math.sqrt(fan_in)
        return jax.random.uniform(k, shape, jnp.float32, -bound, bound)

    return {
        # Conv2d(1, 1, (1, 200)): weight (1,1,1,200) -> stored as (1, 200), bias scalar
        "cw": u(ks[0], (1, EMBED), EMBED),
        "cb": u(ks[1], (1, 1), EMBED),
        # Linear(seq_len, 512): stored transposed as (in, out)
        "w1": u(ks[2], (seq_len, FC1_OUT), seq_len),
        "b1": u(ks[3], (1, FC1_OUT), seq_len),
        # Linear(512, h_dim)
        "w2": u(ks[4], (FC1_OUT, h_dim), FC1_OUT),
        "b2": u(ks[5], (1, h_dim), FC1_OUT),
        # Linear(h_dim, out_dim)
        "w3": u(ks[6], (h_dim, out_dim), h_dim),
        "b3": u(ks[7], (1, out_dim), h_dim),
    }


def reference_forward(x, p):
    """Pure-JAX reference with identical semantics (correctness check)."""
    h = jnp.maximum(jnp.einsum("bse,e->bs", x, p["cw"][0]) + p["cb"][0, 0], 0.0)
    y = jnp.maximum(h @ p["w1"] + p["b1"], 0.0)
    y = jnp.maximum(y @ p["w2"] + p["b2"], 0.0)
    return y @ p["w3"] + p["b3"]


if __name__ == "__main__":
    # Small shapes consistent with the module: gene_num=7 -> SEQ_LEN=8
    B, SEQ_LEN, H_DIM, OUT_DIM = 2, 8, 100, 10

    key = jax.random.PRNGKey(0)
    kx, kp, kx2 = jax.random.split(key, 3)
    x = jax.random.normal(kx, (B, SEQ_LEN, EMBED), jnp.float32)
    params = init_params(kp, SEQ_LEN, H_DIM, OUT_DIM)
    prep, out_dim = prepare_params(params)

    out = jax.block_until_ready(identity_forward(x, prep, out_dim=out_dim))
    ref = reference_forward(x, params)
    assert out.shape == (B, OUT_DIM)
    np.testing.assert_allclose(np.asarray(out), np.asarray(ref),
                               rtol=1e-5, atol=1e-5)

    # Also exercise a multi-step grid with a ragged (non-multiple-of-bt) last block.
    B2 = 20
    x2 = jax.random.normal(kx2, (B2, SEQ_LEN, EMBED), jnp.float32)
    out2 = jax.block_until_ready(identity_forward(x2, prep, out_dim=out_dim, block_b=8))
    ref2 = reference_forward(x2, params)
    assert out2.shape == (B2, OUT_DIM)
    np.testing.assert_allclose(np.asarray(out2), np.asarray(ref2),
                               rtol=1e-5, atol=1e-5)

    print("KERNEL_OK")
</pallas_src>

<mosaic_0001>
module attributes {stable_mosaic.version = 11 : i64} {
  func.func @identity_kernel(%arg0: i32, %arg1: memref<8x8x200xf32, #tpu.memory_space<vmem>>, %arg2: memref<1x200xf32, #tpu.memory_space<vmem>>, %arg3: memref<1x1xf32, #tpu.memory_space<smem>>, %arg4: memref<8x512xf32, #tpu.memory_space<vmem>>, %arg5: memref<1x512xf32, #tpu.memory_space<vmem>>, %arg6: memref<512x128xf32, #tpu.memory_space<vmem>>, %arg7: memref<1x128xf32, #tpu.memory_space<vmem>>, %arg8: memref<128x128xf32, #tpu.memory_space<vmem>>, %arg9: memref<1x128xf32, #tpu.memory_space<vmem>>, %arg10: memref<8x128xf32, #tpu.memory_space<vmem>>) attributes {dimension_semantics = [#tpu.dimension_semantics<parallel>], iteration_bounds = array<i64: 1>, scalar_prefetch = 0 : i64, scratch_operands = 0 : i64, tpu.core_type = #tpu.core_type<tc>, window_params = [{transform_indices = @transform_0, window_bounds = array<i64: 8, 8, 200>}, {pipeline_mode = #tpu.pipeline_mode<synchronous>, transform_indices = @transform_1, window_bounds = array<i64: 1, 200>}, {transform_indices = @transform_2, window_bounds = array<i64: 1, 1>}, {pipeline_mode = #tpu.pipeline_mode<synchronous>, transform_indices = @transform_3, window_bounds = array<i64: 8, 512>}, {pipeline_mode = #tpu.pipeline_mode<synchronous>, transform_indices = @transform_4, window_bounds = array<i64: 1, 512>}, {pipeline_mode = #tpu.pipeline_mode<synchronous>, transform_indices = @transform_5, window_bounds = array<i64: 512, 128>}, {pipeline_mode = #tpu.pipeline_mode<synchronous>, transform_indices = @transform_6, window_bounds = array<i64: 1, 128>}, {pipeline_mode = #tpu.pipeline_mode<synchronous>, transform_indices = @transform_7, window_bounds = array<i64: 128, 128>}, {pipeline_mode = #tpu.pipeline_mode<synchronous>, transform_indices = @transform_8, window_bounds = array<i64: 1, 128>}, {transform_indices = @transform_9, window_bounds = array<i64: 8, 128>}]} {
    %c0 = arith.constant 0 : index
    %c0_0 = arith.constant 0 : index
    %c0_1 = arith.constant 0 : index
    %0 = vector.load %arg1[%c0, %c0_0, %c0_1] : memref<8x8x200xf32, #tpu.memory_space<vmem>>, vector<8x8x200xf32>
    %c0_2 = arith.constant 0 : index
    %c0_3 = arith.constant 0 : index
    %1 = memref.load %arg3[%c0_2, %c0_3] : memref<1x1xf32, #tpu.memory_space<smem>>
    %c0_4 = arith.constant 0 : index
    %c0_5 = arith.constant 0 : index
    %2 = vector.load %arg2[%c0_4, %c0_5] : memref<1x200xf32, #tpu.memory_space<vmem>>, vector<1x200xf32>
    %3 = vector.shape_cast %2 : vector<1x200xf32> to vector<1x1x200xf32>
    %4 = vector.broadcast %3 : vector<1x1x200xf32> to vector<8x8x200xf32>
    %5 = arith.mulf %0, %4 : vector<8x8x200xf32>
    %cst = arith.constant dense<0.000000e+00> : vector<8x8xf32>
    %6 = vector.multi_reduction <add>, %5, %cst [2] : vector<8x8x200xf32> to vector<8x8xf32>
    %7 = vector.broadcast %1 : f32 to vector<8x8xf32>
    %8 = arith.addf %6, %7 : vector<8x8xf32>
    %cst_6 = arith.constant 0.000000e+00 : f32
    %9 = vector.broadcast %cst_6 : f32 to vector<8x8xf32>
    %10 = arith.maximumf %8, %9 : vector<8x8xf32>
    %c0_7 = arith.constant 0 : index
    %c0_8 = arith.constant 0 : index
    %11 = vector.load %arg4[%c0_7, %c0_8] : memref<8x512xf32, #tpu.memory_space<vmem>>, vector<8x512xf32>
    %cst_9 = arith.constant dense<0.000000e+00> : vector<8x512xf32>
    %12 = tpu.matmul %10, %11, %cst_9 {dimension_numbers = #tpu.dot_dimension_numbers<[1], [0], [0], [1], [0, 0, 1, 1], [], []>} : vector<8x8xf32>, vector<8x512xf32>, vector<8x512xf32> -> vector<8x512xf32>
    %c0_10 = arith.constant 0 : index
    %c0_11 = arith.constant 0 : index
    %13 = vector.load %arg5[%c0_10, %c0_11] : memref<1x512xf32, #tpu.memory_space<vmem>>, vector<1x512xf32>
    %14 = vector.broadcast %13 : vector<1x512xf32> to vector<8x512xf32>
    %15 = arith.addf %12, %14 : vector<8x512xf32>
    %cst_12 = arith.constant 0.000000e+00 : f32
    %16 = vector.broadcast %cst_12 : f32 to vector<8x512xf32>
    %17 = arith.maximumf %15, %16 : vector<8x512xf32>
    %c0_13 = arith.constant 0 : index
    %c0_14 = arith.constant 0 : index
    %18 = vector.load %arg6[%c0_13, %c0_14] : memref<512x128xf32, #tpu.memory_space<vmem>>, vector<512x128xf32>
    %cst_15 = arith.constant dense<0.000000e+00> : vector<8x128xf32>
    %19 = tpu.matmul %17, %18, %cst_15 {dimension_numbers = #tpu.dot_dimension_numbers<[1], [0], [0], [1], [0, 0, 1, 1], [], []>} : vector<8x512xf32>, vector<512x128xf32>, vector<8x128xf32> -> vector<8x128xf32>
    %c0_16 = arith.constant 0 : index
    %c0_17 = arith.constant 0 : index
    %20 = vector.load %arg7[%c0_16, %c0_17] : memref<1x128xf32, #tpu.memory_space<vmem>>, vector<1x128xf32>
    %21 = vector.broadcast %20 : vector<1x128xf32> to vector<8x128xf32>
    %22 = arith.addf %19, %21 : vector<8x128xf32>
    %cst_18 = arith.constant 0.000000e+00 : f32
    %23 = vector.broadcast %cst_18 : f32 to vector<8x128xf32>
    %24 = arith.maximumf %22, %23 : vector<8x128xf32>
    %c0_19 = arith.constant 0 : index
    %c0_20 = arith.constant 0 : index
    %25 = vector.load %arg8[%c0_19, %c0_20] : memref<128x128xf32, #tpu.memory_space<vmem>>, vector<128x128xf32>
    %cst_21 = arith.constant dense<0.000000e+00> : vector<8x128xf32>
    %26 = tpu.matmul %24, %25, %cst_21 {dimension_numbers = #tpu.dot_dimension_numbers<[1], [0], [0], [1], [0, 0, 1, 1], [], []>} : vector<8x128xf32>, vector<128x128xf32>, vector<8x128xf32> -> vector<8x128xf32>
    %c0_22 = arith.constant 0 : index
    %c0_23 = arith.constant 0 : index
    %27 = vector.load %arg9[%c0_22, %c0_23] : memref<1x128xf32, #tpu.memory_space<vmem>>, vector<1x128xf32>
    %28 = vector.broadcast %27 : vector<1x128xf32> to vector<8x128xf32>
    %29 = arith.addf %26, %28 : vector<8x128xf32>
    %c0_24 = arith.constant 0 : index
    %c0_25 = arith.constant 0 : index
    %30 = vector.load %arg10[%c0_24, %c0_25] : memref<8x128xf32, #tpu.memory_space<vmem>>, vector<8x128xf32>
    tpu.vector_store %arg10[%c0_24, %c0_25], %29 {strides = array<i32>} : memref<8x128xf32, #tpu.memory_space<vmem>>, vector<8x128xf32>,
    return
  }
  func.func @transform_0(%arg0: i32) -> (i32, i32, i32) {
    %c0_i32 = arith.constant 0 : i32
    %c0_i32_0 = arith.constant 0 : i32
    %c0_i32_1 = arith.constant 0 : i32
    return %arg0, %c0_i32, %c0_i32_0 : i32, i32, i32
  }
  func.func @transform_1(%arg0: i32) -> (i32, i32) {
    %c0_i32 = arith.constant 0 : i32
    %c0_i32_0 = arith.constant 0 : i32
    %c0_i32_1 = arith.constant 0 : i32
    return %c0_i32, %c0_i32_0 : i32, i32
  }
  func.func @transform_2(%arg0: i32) -> (i32, i32) {
    %c0_i32 = arith.constant 0 : i32
    %c0_i32_0 = arith.constant 0 : i32
    %c0_i32_1 = arith.constant 0 : i32
    return %c0_i32, %c0_i32_0 : i32, i32
  }
  func.func @transform_3(%arg0: i32) -> (i32, i32) {
    %c0_i32 = arith.constant 0 : i32
    %c0_i32_0 = arith.constant 0 : i32
    %c0_i32_1 = arith.constant 0 : i32
    return %c0_i32, %c0_i32_0 : i32, i32
  }
  func.func @transform_4(%arg0: i32) -> (i32, i32) {
    %c0_i32 = arith.constant 0 : i32
    %c0_i32_0 = arith.constant 0 : i32
    %c0_i32_1 = arith.constant 0 : i32
    return %c0_i32, %c0_i32_0 : i32, i32
  }
  func.func @transform_5(%arg0: i32) -> (i32, i32) {
    %c0_i32 = arith.constant 0 : i32
    %c0_i32_0 = arith.constant 0 : i32
    %c0_i32_1 = arith.constant 0 : i32
    return %c0_i32, %c0_i32_0 : i32, i32
  }
  func.func @transform_6(%arg0: i32) -> (i32, i32) {
    %c0_i32 = arith.constant 0 : i32
    %c0_i32_0 = arith.constant 0 : i32
    %c0_i32_1 = arith.constant 0 : i32
    return %c0_i32, %c0_i32_0 : i32, i32
  }
  func.func @transform_7(%arg0: i32) -> (i32, i32) {
    %c0_i32 = arith.constant 0 : i32
    %c0_i32_0 = arith.constant 0 : i32
    %c0_i32_1 = arith.constant 0 : i32
    return %c0_i32, %c0_i32_0 : i32, i32
  }
  func.func @transform_8(%arg0: i32) -> (i32, i32) {
    %c0_i32 = arith.constant 0 : i32
    %c0_i32_0 = arith.constant 0 : i32
    %c0_i32_1 = arith.constant 0 : i32
    return %c0_i32, %c0_i32_0 : i32, i32
  }
  func.func @transform_9(%arg0: i32) -> (i32, i32) {
    %c0_i32 = arith.constant 0 : i32
    %c0_i32_0 = arith.constant 0 : i32
    return %arg0, %c0_i32 : i32, i32
  }
}

</mosaic_0001>

<llo_original>
// kernel: identity_forward.1
$region0: #{identity_forward.1}
  #allocation0 [shape = 'u32[]', space=smem, size = 0x4, offset = 0x4, fixed_abs, tag = 'smem constant byte address 0x4 - core index']
  #allocation1 [shape = 'u32[144,128]{1,0:T(1,128)}', space=vmem, size = 0x12000, scoped, tag = 'internal scratch']
  #allocation2 [shape = 'f32[1,1]{1,0:T(1,128)S(6)}', space=smem, size = 0x200, scoped, tag = 'scoped memory for identity_forward.1']
  %s0 = inlined_call_operand.hbm [shape: f32[2,8,200], index: 0, kind: input, shape index: {}]
  %s1 = inlined_call_operand.vmem [shape: f32[1,200], index: 1, kind: input, shape index: {}]
  %s2 = inlined_call_operand.<no memory space> [shape: f32[1,1], index: 2, kind: input, shape index: {}]
  %s3 = inlined_call_operand.hbm [shape: f32[8,512], index: 3, kind: input, shape index: {}]
  %s4 = inlined_call_operand.vmem [shape: f32[1,512], index: 4, kind: input, shape index: {}]
  %s5 = inlined_call_operand.hbm [shape: f32[512,128], index: 5, kind: input, shape index: {}]
  %s6 = inlined_call_operand.vmem [shape: f32[1,128], index: 6, kind: input, shape index: {}]
  %s7 = inlined_call_operand.hbm [shape: f32[128,128], index: 7, kind: input, shape index: {}]
  %s8 = inlined_call_operand.vmem [shape: f32[1,128], index: 8, kind: input, shape index: {}]
  %s9 = inlined_call_operand.hbm [shape: f32[2,128], index: 9, kind: output, shape index: {}]
  %s10 = sld [smem:[#allocation0]]
  $region62: #{identity_forward.1} parent=0
    _
  %s12 = ssub.s32 1, %s10
  %s13 = scalar_select 0, %s12, %s10
  %14 = sst [smem:[#allocation2]] %s2
  $region1: #{identity_forward.1} parent=0
    #allocation3 [shape = 'u8[65536]{0}', space=vmem, size = 0x10000, scoped, tag = 'input window, operand 0, single buffered']
    #allocation4 [shape = 's32[1]{0}', space=sflag, size = 0x4, scoped, tag = 'scoped memory for identity_forward.1']
    #allocation5 [shape = 's32[1]{0}', space=sflag, size = 0x4, scoped, tag = 'scoped memory for identity_forward.1']
    #allocation6 [shape = 'u8[16384]{0}', space=vmem, size = 0x4000, scoped, tag = 'input window, operand 3, single buffered']
    #allocation7 [shape = 's32[1]{0}', space=sflag, size = 0x4, scoped, tag = 'scoped memory for identity_forward.1']
    #allocation8 [shape = 'u8[262144]{0}', space=vmem, size = 0x40000, scoped, tag = 'input window, operand 5, single buffered']
    #allocation9 [shape = 'u8[65536]{0}', space=vmem, size = 0x10000, scoped, tag = 'input window, operand 7, single buffered']
    #allocation10 [shape = 's32[1]{0}', space=sflag, size = 0x4, scoped, tag = 'scoped memory for identity_forward.1']
    #allocation11 [shape = 'u8[4096]{0}', space=vmem, size = 0x1000, scoped, tag = 'output window, operand 0, single buffered']
    %15 = vsyncpa [#allocation4], 0
    %16 = vsyncpa [#allocation7], 0
    %17 = vsyncpa [#allocation10], 0
    %18 = vsyncpa [#allocation5], 0
    // Predicated region
    $region2: #{identity_forward.1} parent=1 // pred_check
      _
    $region3: #{identity_forward.1} parent=1 // pred_check_branch
      %20 = sbr.rel (0) target = $region5
    $region4: #{identity_forward.1} parent=1 // pred_region
      %s22 = ssub.s32 2048, 512
      %23 = vsyncadd [#allocation4], %s22
      %s24 = sshll.u32 [#allocation3], 4
      %s25 = int_to_ptr.vmem [resolvable:$true] %s24
      %30 = dma.hbm_to_vmem [thread:$0]  %s0, 512, %s25, [#allocation4], 256, 256, 16
    $region5: #{identity_forward.1} parent=1 // pred_fallthru
      _
    // Predicated region
    $region6: #{identity_forward.1} parent=1 // pred_check
      _
    $region7: #{identity_forward.1} parent=1 // pred_check_branch
      %32 = sbr.rel (0) target = $region9
    $region8: #{identity_forward.1} parent=1 // pred_region
      _
    $region9: #{identity_forward.1} parent=1 // pred_fallthru
      _
    // Predicated region
    $region10: #{identity_forward.1} parent=1 // pred_check
      _
    $region11: #{identity_forward.1} parent=1 // pred_check_branch
      %34 = sbr.rel (0) target = $region13
    $region12: #{identity_forward.1} parent=1 // pred_region
      _
    $region13: #{identity_forward.1} parent=1 // pred_fallthru
      _
    // Predicated region
    $region14: #{identity_forward.1} parent=1 // pred_check
      _
    $region15: #{identity_forward.1} parent=1 // pred_check_branch
      %36 = sbr.rel (0) target = $region17
    $region16: #{identity_forward.1} parent=1 // pred_region
      %s38 = ssub.s32 512, 512
      %39 = vsyncadd [#allocation7], %s38
      %s41 = sshll.u32 [#allocation6], 4
      %s42 = int_to_ptr.vmem [resolvable:$true] %s41
      %44 = dma.hbm_to_vmem [thread:$0]  %s3, 512, %s42, [#allocation7]
    $region17: #{identity_forward.1} parent=1 // pred_fallthru
      _
    // Predicated region
    $region18: #{identity_forward.1} parent=1 // pred_check
      _
    $region19: #{identity_forward.1} parent=1 // pred_check_branch
      %46 = sbr.rel (0) target = $region21
    $region20: #{identity_forward.1} parent=1 // pred_region
      _
    $region21: #{identity_forward.1} parent=1 // pred_fallthru
      _
    // Predicated region
    $region22: #{identity_forward.1} parent=1 // pred_check
      _
    $region23: #{identity_forward.1} parent=1 // pred_check_branch
      %48 = sbr.rel (0) target = $region25
    $region24: #{identity_forward.1} parent=1 // pred_region
      %s50 = ssub.s32 8192, 8192
      %51 = vsyncadd [#allocation7], %s50
      %s52 = sshll.u32 [#allocation8], 4
      %s53 = int_to_ptr.vmem [resolvable:$true] %s52
      %58 = dma.hbm_to_vmem [thread:$0]  %s5, 8192, %s53, [#allocation7], 128, 128, 8
    $region25: #{identity_forward.1} parent=1 // pred_fallthru
      _
    // Predicated region
    $region26: #{identity_forward.1} parent=1 // pred_check
      _
    $region27: #{identity_forward.1} parent=1 // pred_check_branch
      %60 = sbr.rel (0) target = $region29
    $region28: #{identity_forward.1} parent=1 // pred_region
      _
    $region29: #{identity_forward.1} parent=1 // pred_fallthru
      _
    // Predicated region
    $region30: #{identity_forward.1} parent=1 // pred_check
      _
    $region31: #{identity_forward.1} parent=1 // pred_check_branch
      %62 = sbr.rel (0) target = $region33
    $region32: #{identity_forward.1} parent=1 // pred_region
      %s64 = ssub.s32 2048, 2048
      %65 = vsyncadd [#allocation10], %s64
      %s66 = sshll.u32 [#allocation9], 4
      %s67 = int_to_ptr.vmem [resolvable:$true] %s66
      %72 = dma.hbm_to_vmem [thread:$0]  %s7, 2048, %s67, [#allocation10], 128, 128, 8
    $region33: #{identity_forward.1} parent=1 // pred_fallthru
      _
    // Predicated region
    $region34: #{identity_forward.1} parent=1 // pred_check
      _
    $region35: #{identity_forward.1} parent=1 // pred_check_branch
      %74 = sbr.rel (0) target = $region37
    $region36: #{identity_forward.1} parent=1 // pred_region
      _
    $region37: #{identity_forward.1} parent=1 // pred_fallthru
      _
    // Predicated region
    $region38: #{identity_forward.1} parent=1 // pred_check
      _
    $region39: #{identity_forward.1} parent=1 // pred_check_branch
      %76 = sbr.rel (0) target = $region41
    $region40: #{identity_forward.1} parent=1 // pred_region
      %77 = dma.done [#allocation4], 2048
    $region41: #{identity_forward.1} parent=1 // pred_fallthru
      _
    // Predicated region
    $region42: #{identity_forward.1} parent=1 // pred_check
      _
    $region43: #{identity_forward.1} parent=1 // pred_check_branch
      %79 = sbr.rel (0) target = $region45
    $region44: #{identity_forward.1} parent=1 // pred_region
      %80 = dma.done [#allocation7], 512
    $region45: #{identity_forward.1} parent=1 // pred_fallthru
      _
    // Predicated region
    $region46: #{identity_forward.1} parent=1 // pred_check
      _
    $region47: #{identity_forward.1} parent=1 // pred_check_branch
      %82 = sbr.rel (0) target = $region49
    $region48: #{identity_forward.1} parent=1 // pred_region
      %83 = dma.done [#allocation7], 8192
    $region49: #{identity_forward.1} parent=1 // pred_fallthru
      _
    // Predicated region
    $region50: #{identity_forward.1} parent=1 // pred_check
      _
    $region51: #{identity_forward.1} parent=1 // pred_check_branch
      %85 = sbr.rel (0) target = $region53
    $region52: #{identity_forward.1} parent=1 // pred_region
      %86 = dma.done [#allocation10], 2048
    $region53: #{identity_forward.1} parent=1 // pred_fallthru
      _
    %v87 = vld [vmem:[#allocation3] sm:$0xff]
    %v88 = vld [vmem:[#allocation3 + $0x8] sm:$0xff]
    %v89 = vld [vmem:[#allocation3 + $0x10] sm:$0xff]
    %v90 = vld [vmem:[#allocation3 + $0x18] sm:$0xff]
    %v91 = vld [vmem:[#allocation3 + $0x20] sm:$0xff]
    %v92 = vld [vmem:[#allocation3 + $0x28] sm:$0xff]
    %v93 = vld [vmem:[#allocation3 + $0x30] sm:$0xff]
    %v94 = vld [vmem:[#allocation3 + $0x38] sm:$0xff]
    %v95 = vld [vmem:[#allocation3 + $0x40] sm:$0xff]
    %v96 = vld [vmem:[#allocation3 + $0x48] sm:$0xff]
    %v97 = vld [vmem:[#allocation3 + $0x50] sm:$0xff]
    %v98 = vld [vmem:[#allocation3 + $0x58] sm:$0xff]
    %v99 = vld [vmem:[#allocation3 + $0x60] sm:$0xff]
    %v100 = vld [vmem:[#allocation3 + $0x68] sm:$0xff]
    %v101 = vld [vmem:[#allocation3 + $0x70] sm:$0xff]
    %v102 = vld [vmem:[#allocation3 + $0x78] sm:$0xff]
    %s103 = sld [smem:[#allocation2]]
    %v104 = vld [vmem:[%s1] sm:$0x3]
    %v106 = vlaneseq
    %v107 = vshrl.u32 %v106, 7
    %v108 = vsub.s32 0, %v107
    %v109 = vrot.slane %v104, %v108
    %v110 = vlaneseq
    %v111 = vshrl.u32 %v110, 7
    %v112 = vsub.s32 1, %v111
    %v113 = vrot.slane %v104, %v112
    %v116 = vmul.f32 %v87, %v109
    %v117 = vmul.f32 %v88, %v113
    %v118 = vmul.f32 %v89, %v109
    %v119 = vmul.f32 %v90, %v113
    %v120 = vmul.f32 %v91, %v109
    %v121 = vmul.f32 %v92, %v113
    %v122 = vmul.f32 %v93, %v109
    %v123 = vmul.f32 %v94, %v113
    %v124 = vmul.f32 %v95, %v109
    %v125 = vmul.f32 %v96, %v113
    %v126 = vmul.f32 %v97, %v109
    %v127 = vmul.f32 %v98, %v113
    %v128 = vmul.f32 %v99, %v109
    %v129 = vmul.f32 %v100, %v113
    %v130 = vmul.f32 %v101, %v109
    %v131 = vmul.f32 %v102, %v113
    %vm132 = vcmask 588800
    %v133 = vsel %vm132, %v117, 0.0
    %v134 = vadd.f32 %v116, %v133
    %135 = vadd.xlane.f32.xlu0 %v134
    %v136 = vpop.xlane.xlu0 %135
    %v137 = vsel %vm132, %v119, 0.0
    %v138 = vadd.f32 %v118, %v137
    %139 = vadd.xlane.f32.xlu0 %v138
    %v140 = vpop.xlane.xlu0 %139
    %v141 = vsel %vm132, %v121, 0.0
    %v142 = vadd.f32 %v120, %v141
    %143 = vadd.xlane.f32.xlu0 %v142
    %v144 = vpop.xlane.xlu0 %143
    %v145 = vsel %vm132, %v123, 0.0
    %v146 = vadd.f32 %v122, %v145
    %147 = vadd.xlane.f32.xlu0 %v146
    %v148 = vpop.xlane.xlu0 %147
    %v149 = vsel %vm132, %v125, 0.0
    %v150 = vadd.f32 %v124, %v149
    %151 = vadd.xlane.f32.xlu0 %v150
    %v152 = vpop.xlane.xlu0 %151
    %v153 = vsel %vm132, %v127, 0.0
    %v154 = vadd.f32 %v126, %v153
    %155 = vadd.xlane.f32.xlu0 %v154
    %v156 = vpop.xlane.xlu0 %155
    %v157 = vsel %vm132, %v129, 0.0
    %v158 = vadd.f32 %v128, %v157
    %159 = vadd.xlane.f32.xlu0 %v158
    %v160 = vpop.xlane.xlu0 %159
    %v161 = vsel %vm132, %v131, 0.0
    %v162 = vadd.f32 %v130, %v161
    %163 = vadd.xlane.f32.xlu0 %v162
    %v164 = vpop.xlane.xlu0 %163
    %v165 = vstv %s103
    %v166 = vadd.f32 %v136, %v165
    %v167 = vadd.f32 %v140, %v165
    %v168 = vadd.f32 %v144, %v165
    %v169 = vadd.f32 %v148, %v165
    %v170 = vadd.f32 %v152, %v165
    %v171 = vadd.f32 %v156, %v165
    %v172 = vadd.f32 %v160, %v165
    %v173 = vadd.f32 %v164, %v165
    %v174 = vmax.f32 %v166, 0.0
    %v175 = vmax.f32 %v167, 0.0
    %v176 = vmax.f32 %v168, 0.0
    %v177 = vmax.f32 %v169, 0.0
    %v178 = vmax.f32 %v170, 0.0
    %v179 = vmax.f32 %v171, 0.0
    %v180 = vmax.f32 %v172, 0.0
    %v181 = vmax.f32 %v173, 0.0
    %v182 = vld [vmem:[#allocation6] sm:$0xff]
    %v183 = vld [vmem:[#allocation6 + $0x8] sm:$0xff]
    %v184 = vld [vmem:[#allocation6 + $0x10] sm:$0xff]
    %v185 = vld [vmem:[#allocation6 + $0x18] sm:$0xff]
    %v186 = vld [vmem:[%s4] sm:$0xf]
    %v188 = vlaneseq
    %v189 = vshrl.u32 %v188, 7
    %v190 = vsub.s32 0, %v189
    %v191 = vrot.slane %v186, %v190
    %v192 = vlaneseq
    %v193 = vshrl.u32 %v192, 7
    %v194 = vsub.s32 1, %v193
    %v195 = vrot.slane %v186, %v194
    %v196 = vlaneseq
    %v197 = vshrl.u32 %v196, 7
    %v198 = vsub.s32 2, %v197
    %v199 = vrot.slane %v186, %v198
    %v200 = vlaneseq
    %v201 = vshrl.u32 %v200, 7
    %v202 = vsub.s32 3, %v201
    %v203 = vrot.slane %v186, %v202
    %v216 = vlaneseq
    %v217 = vand.u32 %v216, 127
    %v218 = vlaneseq
    %v219 = vshrl.u32 %v218, 7
    %v220 = vsub.s32 %v217, %v219
    %v221 = vrot.slane %v174, %v220
    %v222 = vlaneseq
    %v223 = vshrl.u32 %v222, 7
    %v224 = vsub.s32 %v217, %v223
    %v225 = vrot.slane %v175, %v224
    %v226 = vlaneseq
    %v227 = vshrl.u32 %v226, 7
    %v228 = vsub.s32 %v217, %v227
    %v229 = vrot.slane %v176, %v228
    %v230 = vlaneseq
    %v231 = vshrl.u32 %v230, 7
    %v232 = vsub.s32 %v217, %v231
    %v233 = vrot.slane %v177, %v232
    %v234 = vlaneseq
    %v235 = vshrl.u32 %v234, 7
    %v236 = vsub.s32 %v217, %v235
    %v237 = vrot.slane %v178, %v236
    %v238 = vlaneseq
    %v239 = vshrl.u32 %v238, 7
    %v240 = vsub.s32 %v217, %v239
    %v241 = vrot.slane %v179, %v240
    %v242 = vlaneseq
    %v243 = vshrl.u32 %v242, 7
    %v244 = vsub.s32 %v217, %v243
    %v245 = vrot.slane %v180, %v244
    %v246 = vlaneseq
    %v247 = vshrl.u32 %v246, 7
    %v248 = vsub.s32 %v217, %v247
    %v249 = vrot.slane %v181, %v248
    %vm250 = vcmask 1041409
    %v251 = vsel %vm250, %v225, %v221
    %vm252 = vcmask 1042434
    %v253 = vsel %vm252, %v229, %v251
    %vm254 = vcmask 1043459
    %v255 = vsel %vm254, %v233, %v253
    %vm256 = vcmask 1044484
    %v257 = vsel %vm256, %v237, %v255
    %vm258 = vcmask 1045509
    %v259 = vsel %vm258, %v241, %v257
    %vm260 = vcmask 1046534
    %v261 = vsel %vm260, %v245, %v259
    %vm262 = vcmask 1047559
    %v263 = vsel %vm262, %v249, %v261
    %vm264 = vcmask 64512
    %v265 = vsel %vm264, %v263, 0
    %267 = vmatprep.subr.mxu0 %v183
    %268 = vmatpush1.msra.mxu0 %v182
    %269 = vmatprep.subr.mxu0 0.0
    %270 = vmatpush1.msra.mxu0 0.0
    %271 = vmatprep.subr.mxu0 0.0
    %272 = vmatpush1.msra.mxu0 0.0
    %273 = vmatprep.subr.mxu0 0.0
    %274 = vmatpush1.msra.mxu0 0.0
    %275 = vmatprep.subr.mxu0 0.0
    %276 = vmatpush1.msra.mxu0 0.0
    %277 = vmatprep.subr.mxu0 0.0
    %278 = vmatpush1.msra.mxu0 0.0
    %279 = vmatprep.subr.mxu0 0.0
    %280 = vmatpush1.msra.mxu0 0.0
    %281 = vmatprep.subr.mxu0 0.0
    %282 = vmatpush1.msra.mxu0 0.0
    %283 = vmatprep.subr.mxu0 0.0
    %284 = vmatpush1.msra.mxu0 0.0
    %285 = vmatprep.subr.mxu0 0.0
    %286 = vmatpush1.msra.mxu0 0.0
    %287 = vmatprep.subr.mxu0 0.0
    %288 = vmatpush1.msra.mxu0 0.0
    %289 = vmatprep.subr.mxu0 0.0
    %290 = vmatpush1.msra.mxu0 0.0
    %291 = vmatprep.subr.mxu0 0.0
    %292 = vmatpush1.msra.mxu0 0.0
    %293 = vmatprep.subr.mxu0 0.0
    %294 = vmatpush1.msra.mxu0 0.0
    %295 = vmatprep.subr.mxu0 0.0
    %296 = vmatpush1.msra.mxu0 0.0
    %297 = vmatprep.subr.mxu0 0.0
    %298 = vmatpush1.msra.mxu0 0.0
    %299 = vmatprep.subr.mxu0 0.0
    %300 = vmatpush1.msra.mxu0 0.0
    %301 = vmatprep.subr.mxu0 0.0
    %302 = vmatpush1.msra.mxu0 0.0
    %303 = vmatprep.subr.mxu0 0.0
    %304 = vmatpush1.msra.mxu0 0.0
    %305 = vmatprep.subr.mxu0 0.0
    %306 = vmatpush1.msra.mxu0 0.0
    %307 = vmatprep.subr.mxu0 0.0
    %308 = vmatpush1.msra.mxu0 0.0
    %309 = vmatprep.subr.mxu0 0.0
    %310 = vmatpush1.msra.mxu0 0.0
    %311 = vmatprep.subr.mxu0 0.0
    %312 = vmatpush1.msra.mxu0 0.0
    %313 = vmatprep.subr.mxu0 0.0
    %314 = vmatpush1.msra.mxu0 0.0
    %315 = vmatprep.subr.mxu0 0.0
    %316 = vmatpush1.msra.mxu0 0.0
    %317 = vmatprep.subr.mxu0 0.0
    %318 = vmatpush1.msra.mxu0 0.0
    %319 = vmatprep.subr.mxu0 0.0
    %320 = vmatpush1.msra.mxu0 0.0
    %321 = vmatprep.subr.mxu0 0.0
    %322 = vmatpush1.msra.mxu0 0.0
    %323 = vmatprep.subr.mxu0 0.0
    %324 = vmatpush1.msra.mxu0 0.0
    %325 = vmatprep.subr.mxu0 0.0
    %326 = vmatpush1.msra.mxu0 0.0
    %327 = vmatprep.subr.mxu0 0.0
    %328 = vmatpush1.msra.mxu0 0.0
    %329 = vmatprep.subr.mxu0 0.0
    %330 = vmatpush1.msra.mxu0 0.0
    %331 = vmatprep.mubr.f32.mxu0 0.0
    %332 = vmatmul.mubr.f32.gmra.mrb[0].mxu0 %v265
    %v333 = vpop.f32.mrb[0].mxu0
    %v334 = vadd.f32 %v191, %v333
    %v335 = vpop.f32.mrb[0].mxu0
    %v336 = vadd.f32 %v195, %v335
    %337 = vdwg.mxu0
    %338 = vmatprep.subr.mxu0 %v185
    %339 = vmatpush1.msra.mxu0 %v184
    %340 = vmatprep.subr.mxu0 0.0
    %341 = vmatpush1.msra.mxu0 0.0
    %342 = vmatprep.subr.mxu0 0.0
    %343 = vmatpush1.msra.mxu0 0.0
    %344 = vmatprep.subr.mxu0 0.0
    %345 = vmatpush1.msra.mxu0 0.0
    %346 = vmatprep.subr.mxu0 0.0
    %347 = vmatpush1.msra.mxu0 0.0
    %348 = vmatprep.subr.mxu0 0.0
    %349 = vmatpush1.msra.mxu0 0.0
    %350 = vmatprep.subr.mxu0 0.0
    %351 = vmatpush1.msra.mxu0 0.0
    %352 = vmatprep.subr.mxu0 0.0
    %353 = vmatpush1.msra.mxu0 0.0
    %354 = vmatprep.subr.mxu0 0.0
    %355 = vmatpush1.msra.mxu0 0.0
    %356 = vmatprep.subr.mxu0 0.0
    %357 = vmatpush1.msra.mxu0 0.0
    %358 = vmatprep.subr.mxu0 0.0
    %359 = vmatpush1.msra.mxu0 0.0
    %360 = vmatprep.subr.mxu0 0.0
    %361 = vmatpush1.msra.mxu0 0.0
    %362 = vmatprep.subr.mxu0 0.0
    %363 = vmatpush1.msra.mxu0 0.0
    %364 = vmatprep.subr.mxu0 0.0
    %365 = vmatpush1.msra.mxu0 0.0
    %366 = vmatprep.subr.mxu0 0.0
    %367 = vmatpush1.msra.mxu0 0.0
    %368 = vmatprep.subr.mxu0 0.0
    %369 = vmatpush1.msra.mxu0 0.0
    %370 = vmatprep.subr.mxu0 0.0
    %371 = vmatpush1.msra.mxu0 0.0
    %372 = vmatprep.subr.mxu0 0.0
    %373 = vmatpush1.msra.mxu0 0.0
    %374 = vmatprep.subr.mxu0 0.0
    %375 = vmatpush1.msra.mxu0 0.0
    %376 = vmatprep.subr.mxu0 0.0
    %377 = vmatpush1.msra.mxu0 0.0
    %378 = vmatprep.subr.mxu0 0.0
    %379 = vmatpush1.msra.mxu0 0.0
    %380 = vmatprep.subr.mxu0 0.0
    %381 = vmatpush1.msra.mxu0 0.0
    %382 = vmatprep.subr.mxu0 0.0
    %383 = vmatpush1.msra.mxu0 0.0
    %384 = vmatprep.subr.mxu0 0.0
    %385 = vmatpush1.msra.mxu0 0.0
    %386 = vmatprep.subr.mxu0 0.0
    %387 = vmatpush1.msra.mxu0 0.0
    %388 = vmatprep.subr.mxu0 0.0
    %389 = vmatpush1.msra.mxu0 0.0
    %390 = vmatprep.subr.mxu0 0.0
    %391 = vmatpush1.msra.mxu0 0.0
    %392 = vmatprep.subr.mxu0 0.0
    %393 = vmatpush1.msra.mxu0 0.0
    %394 = vmatprep.subr.mxu0 0.0
    %395 = vmatpush1.msra.mxu0 0.0
    %396 = vmatprep.subr.mxu0 0.0
    %397 = vmatpush1.msra.mxu0 0.0
    %398 = vmatprep.subr.mxu0 0.0
    %399 = vmatpush1.msra.mxu0 0.0
    %400 = vmatprep.subr.mxu0 0.0
    %401 = vmatpush1.msra.mxu0 0.0
    %402 = vmatprep.mubr.f32.mxu0 0.0
    %403 = vmatmul.mubr.f32.gmra.mrb[0].mxu0 %v265
    %v404 = vpop.f32.mrb[0].mxu0
    %v405 = vadd.f32 %v199, %v404
    %v406 = vpop.f32.mrb[0].mxu0
    %v407 = vadd.f32 %v203, %v406
    %408 = vdwg.mxu0
    %v409 = vmax.f32 %v334, 0.0
    %v410 = vmax.f32 %v336, 0.0
    %v411 = vmax.f32 %v405, 0.0
    %v412 = vmax.f32 %v407, 0.0
    %v413 = vld [vmem:[#allocation8] sm:$0xff]
    %v414 = vld [vmem:[#allocation8 + $0x8] sm:$0xff]
    %v415 = vld [vmem:[#allocation8 + $0x10] sm:$0xff]
    %v416 = vld [vmem:[#allocation8 + $0x18] sm:$0xff]
    %v417 = vld [vmem:[#allocation8 + $0x20] sm:$0xff]
    %v418 = vld [vmem:[#allocation8 + $0x28] sm:$0xff]
    %v419 = vld [vmem:[#allocation8 + $0x30] sm:$0xff]
    %v420 = vld [vmem:[#allocation8 + $0x38] sm:$0xff]
    %v421 = vld [vmem:[#allocation8 + $0x40] sm:$0xff]
    %v422 = vld [vmem:[#allocation8 + $0x48] sm:$0xff]
    %v423 = vld [vmem:[#allocation8 + $0x50] sm:$0xff]
    %v424 = vld [vmem:[#allocation8 + $0x58] sm:$0xff]
    %v425 = vld [vmem:[#allocation8 + $0x60] sm:$0xff]
    %v426 = vld [vmem:[#allocation8 + $0x68] sm:$0xff]
    %v427 = vld [vmem:[#allocation8 + $0x70] sm:$0xff]
    %v428 = vld [vmem:[#allocation8 + $0x78] sm:$0xff]
    %v429 = vld [vmem:[#allocation8 + $0x80] sm:$0xff]
    %v430 = vld [vmem:[#allocation8 + $0x88] sm:$0xff]
    %v431 = vld [vmem:[#allocation8 + $0x90] sm:$0xff]
    %v432 = vld [vmem:[#allocation8 + $0x98] sm:$0xff]
    %v433 = vld [vmem:[#allocation8 + $0xa0] sm:$0xff]
    %v434 = vld [vmem:[#allocation8 + $0xa8] sm:$0xff]
    %v435 = vld [vmem:[#allocation8 + $0xb0] sm:$0xff]
    %v436 = vld [vmem:[#allocation8 + $0xb8] sm:$0xff]
    %v437 = vld [vmem:[#allocation8 + $0xc0] sm:$0xff]
    %v438 = vld [vmem:[#allocation8 + $0xc8] sm:$0xff]
    %v439 = vld [vmem:[#allocation8 + $0xd0] sm:$0xff]
    %v440 = vld [vmem:[#allocation8 + $0xd8] sm:$0xff]
    %v441 = vld [vmem:[#allocation8 + $0xe0] sm:$0xff]
    %v442 = vld [vmem:[#allocation8 + $0xe8] sm:$0xff]
    %v443 = vld [vmem:[#allocation8 + $0xf0] sm:$0xff]
    %v444 = vld [vmem:[#allocation8 + $0xf8] sm:$0xff]
    %v445 = vld [vmem:[#allocation8 + $0x100] sm:$0xff]
    %v446 = vld [vmem:[#allocation8 + $0x108] sm:$0xff]
    %v447 = vld [vmem:[#allocation8 + $0x110] sm:$0xff]
    %v448 = vld [vmem:[#allocation8 + $0x118] sm:$0xff]
    %v449 = vld [vmem:[#allocation8 + $0x120] sm:$0xff]
    %v450 = vld [vmem:[#allocation8 + $0x128] sm:$0xff]
    %v451 = vld [vmem:[#allocation8 + $0x130] sm:$0xff]
    %v452 = vld [vmem:[#allocation8 + $0x138] sm:$0xff]
    %v453 = vld [vmem:[#allocation8 + $0x140] sm:$0xff]
    %v454 = vld [vmem:[#allocation8 + $0x148] sm:$0xff]
    %v455 = vld [vmem:[#allocation8 + $0x150] sm:$0xff]
    %v456 = vld [vmem:[#allocation8 + $0x158] sm:$0xff]
    %v457 = vld [vmem:[#allocation8 + $0x160] sm:$0xff]
    %v458 = vld [vmem:[#allocation8 + $0x168] sm:$0xff]
    %v459 = vld [vmem:[#allocation8 + $0x170] sm:$0xff]
    %v460 = vld [vmem:[#allocation8 + $0x178] sm:$0xff]
    %v461 = vld [vmem:[#allocation8 + $0x180] sm:$0xff]
    %v462 = vld [vmem:[#allocation8 + $0x188] sm:$0xff]
    %v463 = vld [vmem:[#allocation8 + $0x190] sm:$0xff]
    %v464 = vld [vmem:[#allocation8 + $0x198] sm:$0xff]
    %v465 = vld [vmem:[#allocation8 + $0x1a0] sm:$0xff]
    %v466 = vld [vmem:[#allocation8 + $0x1a8] sm:$0xff]
    %v467 = vld [vmem:[#allocation8 + $0x1b0] sm:$0xff]
    %v468 = vld [vmem:[#allocation8 + $0x1b8] sm:$0xff]
    %v469 = vld [vmem:[#allocation8 + $0x1c0] sm:$0xff]
    %v470 = vld [vmem:[#allocation8 + $0x1c8] sm:$0xff]
    %v471 = vld [vmem:[#allocation8 + $0x1d0] sm:$0xff]
    %v472 = vld [vmem:[#allocation8 + $0x1d8] sm:$0xff]
    %v473 = vld [vmem:[#allocation8 + $0x1e0] sm:$0xff]
    %v474 = vld [vmem:[#allocation8 + $0x1e8] sm:$0xff]
    %v475 = vld [vmem:[#allocation8 + $0x1f0] sm:$0xff]
    %v476 = vld [vmem:[#allocation8 + $0x1f8] sm:$0xff]
    %v477 = vld [vmem:[%s6] sm:$0x1]
    %v479 = vlaneseq
    %v480 = vshrl.u32 %v479, 7
    %v481 = vsub.s32 0, %v480
    %v482 = vrot.slane %v477, %v481
    %484 = vmatprep.subr.mxu0 0.0
    %485 = vmatpush1.msra.mxu0 %v413
    %486 = vmatprep.subr.mxu0 0.0
    %487 = vmatpush1.msra.mxu0 %v414
    %488 = vmatprep.subr.mxu0 0.0
    %489 = vmatpush1.msra.mxu0 %v415
    %490 = vmatprep.subr.mxu0 0.0
    %491 = vmatpush1.msra.mxu0 %v416
    %492 = vmatprep.subr.mxu0 0.0
    %493 = vmatpush1.msra.mxu0 %v417
    %494 = vmatprep.subr.mxu0 0.0
    %495 = vmatpush1.msra.mxu0 %v418
    %496 = vmatprep.subr.mxu0 0.0
    %497 = vmatpush1.msra.mxu0 %v419
    %498 = vmatprep.subr.mxu0 0.0
    %499 = vmatpush1.msra.mxu0 %v420
    %500 = vmatprep.subr.mxu0 0.0
    %501 = vmatpush1.msra.mxu0 %v421
    %502 = vmatprep.subr.mxu0 0.0
    %503 = vmatpush1.msra.mxu0 %v422
    %504 = vmatprep.subr.mxu0 0.0
    %505 = vmatpush1.msra.mxu0 %v423
    %506 = vmatprep.subr.mxu0 0.0
    %507 = vmatpush1.msra.mxu0 %v424
    %508 = vmatprep.subr.mxu0 0.0
    %509 = vmatpush1.msra.mxu0 %v425
    %510 = vmatprep.subr.mxu0 0.0
    %511 = vmatpush1.msra.mxu0 %v426
    %512 = vmatprep.subr.mxu0 0.0
    %513 = vmatpush1.msra.mxu0 %v427
    %514 = vmatprep.subr.mxu0 0.0
    %515 = vmatpush1.msra.mxu0 %v428
    %516 = vmatprep.subr.mxu0 0.0
    %517 = vmatpush1.msra.mxu0 %v429
    %518 = vmatprep.subr.mxu0 0.0
    %519 = vmatpush1.msra.mxu0 %v430
    %520 = vmatprep.subr.mxu0 0.0
    %521 = vmatpush1.msra.mxu0 %v431
    %522 = vmatprep.subr.mxu0 0.0
    %523 = vmatpush1.msra.mxu0 %v432
    %524 = vmatprep.subr.mxu0 0.0
    %525 = vmatpush1.msra.mxu0 %v433
    %526 = vmatprep.subr.mxu0 0.0
    %527 = vmatpush1.msra.mxu0 %v434
    %528 = vmatprep.subr.mxu0 0.0
    %529 = vmatpush1.msra.mxu0 %v435
    %530 = vmatprep.subr.mxu0 0.0
    %531 = vmatpush1.msra.mxu0 %v436
    %532 = vmatprep.subr.mxu0 0.0
    %533 = vmatpush1.msra.mxu0 %v437
    %534 = vmatprep.subr.mxu0 0.0
    %535 = vmatpush1.msra.mxu0 %v438
    %536 = vmatprep.subr.mxu0 0.0
    %537 = vmatpush1.msra.mxu0 %v439
    %538 = vmatprep.subr.mxu0 0.0
    %539 = vmatpush1.msra.mxu0 %v440
    %540 = vmatprep.subr.mxu0 0.0
    %541 = vmatpush1.msra.mxu0 %v441
    %542 = vmatprep.subr.mxu0 0.0
    %543 = vmatpush1.msra.mxu0 %v442
    %544 = vmatprep.subr.mxu0 0.0
    %545 = vmatpush1.msra.mxu0 %v443
    %546 = vmatprep.subr.mxu0 0.0
    %547 = vmatpush1.msra.mxu0 %v444
    %548 = vmatprep.mubr.f32.mxu0 %v410
    %549 = vmatmul.mubr.f32.gmra.mrb[0].mxu0 %v409
    %v550 = vpop.f32.mrb[0].mxu0
    %v551 = vadd.f32 %v482, %v550
    %v552 = vpop.f32.mrb[0].mxu0
    %553 = vdwg.mxu0
    %554 = vmatprep.subr.mxu0 0.0
    %555 = vmatpush1.msra.mxu0 %v445
    %556 = vmatprep.subr.mxu0 0.0
    %557 = vmatpush1.msra.mxu0 %v446
    %558 = vmatprep.subr.mxu0 0.0
    %559 = vmatpush1.msra.mxu0 %v447
    %560 = vmatprep.subr.mxu0 0.0
    %561 = vmatpush1.msra.mxu0 %v448
    %562 = vmatprep.subr.mxu0 0.0
    %563 = vmatpush1.msra.mxu0 %v449
    %564 = vmatprep.subr.mxu0 0.0
    %565 = vmatpush1.msra.mxu0 %v450
    %566 = vmatprep.subr.mxu0 0.0
    %567 = vmatpush1.msra.mxu0 %v451
    %568 = vmatprep.subr.mxu0 0.0
    %569 = vmatpush1.msra.mxu0 %v452
    %570 = vmatprep.subr.mxu0 0.0
    %571 = vmatpush1.msra.mxu0 %v453
    %572 = vmatprep.subr.mxu0 0.0
    %573 = vmatpush1.msra.mxu0 %v454
    %574 = vmatprep.subr.mxu0 0.0
    %575 = vmatpush1.msra.mxu0 %v455
    %576 = vmatprep.subr.mxu0 0.0
    %577 = vmatpush1.msra.mxu0 %v456
    %578 = vmatprep.subr.mxu0 0.0
    %579 = vmatpush1.msra.mxu0 %v457
    %580 = vmatprep.subr.mxu0 0.0
    %581 = vmatpush1.msra.mxu0 %v458
    %582 = vmatprep.subr.mxu0 0.0
    %583 = vmatpush1.msra.mxu0 %v459
    %584 = vmatprep.subr.mxu0 0.0
    %585 = vmatpush1.msra.mxu0 %v460
    %586 = vmatprep.subr.mxu0 0.0
    %587 = vmatpush1.msra.mxu0 %v461
    %588 = vmatprep.subr.mxu0 0.0
    %589 = vmatpush1.msra.mxu0 %v462
    %590 = vmatprep.subr.mxu0 0.0
    %591 = vmatpush1.msra.mxu0 %v463
    %592 = vmatprep.subr.mxu0 0.0
    %593 = vmatpush1.msra.mxu0 %v464
    %594 = vmatprep.subr.mxu0 0.0
    %595 = vmatpush1.msra.mxu0 %v465
    %596 = vmatprep.subr.mxu0 0.0
    %597 = vmatpush1.msra.mxu0 %v466
    %598 = vmatprep.subr.mxu0 0.0
    %599 = vmatpush1.msra.mxu0 %v467
    %600 = vmatprep.subr.mxu0 0.0
    %601 = vmatpush1.msra.mxu0 %v468
    %602 = vmatprep.subr.mxu0 0.0
    %603 = vmatpush1.msra.mxu0 %v469
    %604 = vmatprep.subr.mxu0 0.0
    %605 = vmatpush1.msra.mxu0 %v470
    %606 = vmatprep.subr.mxu0 0.0
    %607 = vmatpush1.msra.mxu0 %v471
    %608 = vmatprep.subr.mxu0 0.0
    %609 = vmatpush1.msra.mxu0 %v472
    %610 = vmatprep.subr.mxu0 0.0
    %611 = vmatpush1.msra.mxu0 %v473
    %612 = vmatprep.subr.mxu0 0.0
    %613 = vmatpush1.msra.mxu0 %v474
    %614 = vmatprep.subr.mxu0 0.0
    %615 = vmatpush1.msra.mxu0 %v475
    %616 = vmatprep.subr.mxu0 0.0
    %617 = vmatpush1.msra.mxu0 %v476
    %618 = vmatprep.mubr.f32.mxu0 %v412
    %619 = vmatmul.mubr.f32.gmra.mrb[0].mxu0 %v411
    %v620 = vpop.f32.mrb[0].mxu0
    %v621 = vadd.f32 %v551, %v620
    %v622 = vpop.f32.mrb[0].mxu0
    %623 = vdwg.mxu0
    %v624 = vmax.f32 %v621, 0.0
    %v625 = vld [vmem:[#allocation9] sm:$0xff]
    %v626 = vld [vmem:[#allocation9 + $0x8] sm:$0xff]
    %v627 = vld [vmem:[#allocation9 + $0x10] sm:$0xff]
    %v628 = vld [vmem:[#allocation9 + $0x18] sm:$0xff]
    %v629 = vld [vmem:[#allocation9 + $0x20] sm:$0xff]
    %v630 = vld [vmem:[#allocation9 + $0x28] sm:$0xff]
    %v631 = vld [vmem:[#allocation9 + $0x30] sm:$0xff]
    %v632 = vld [vmem:[#allocation9 + $0x38] sm:$0xff]
    %v633 = vld [vmem:[#allocation9 + $0x40] sm:$0xff]
    %v634 = vld [vmem:[#allocation9 + $0x48] sm:$0xff]
    %v635 = vld [vmem:[#allocation9 + $0x50] sm:$0xff]
    %v636 = vld [vmem:[#allocation9 + $0x58] sm:$0xff]
    %v637 = vld [vmem:[#allocation9 + $0x60] sm:$0xff]
    %v638 = vld [vmem:[#allocation9 + $0x68] sm:$0xff]
    %v639 = vld [vmem:[#allocation9 + $0x70] sm:$0xff]
    %v640 = vld [vmem:[#allocation9 + $0x78] sm:$0xff]
    %v641 = vld [vmem:[%s8] sm:$0x1]
    %v643 = vlaneseq
    %v644 = vshrl.u32 %v643, 7
    %v645 = vsub.s32 0, %v644
    %v646 = vrot.slane %v641, %v645
    %648 = vmatprep.subr.mxu0 0.0
    %649 = vmatpush1.msra.mxu0 %v625
    %650 = vmatprep.subr.mxu0 0.0
    %651 = vmatpush1.msra.mxu0 %v626
    %652 = vmatprep.subr.mxu0 0.0
    %653 = vmatpush1.msra.mxu0 %v627
    %654 = vmatprep.subr.mxu0 0.0
    %655 = vmatpush1.msra.mxu0 %v628
    %656 = vmatprep.subr.mxu0 0.0
    %657 = vmatpush1.msra.mxu0 %v629
    %658 = vmatprep.subr.mxu0 0.0
    %659 = vmatpush1.msra.mxu0 %v630
    %660 = vmatprep.subr.mxu0 0.0
    %661 = vmatpush1.msra.mxu0 %v631
    %662 = vmatprep.subr.mxu0 0.0
    %663 = vmatpush1.msra.mxu0 %v632
    %664 = vmatprep.subr.mxu0 0.0
    %665 = vmatpush1.msra.mxu0 %v633
    %666 = vmatprep.subr.mxu0 0.0
    %667 = vmatpush1.msra.mxu0 %v634
    %668 = vmatprep.subr.mxu0 0.0
    %669 = vmatpush1.msra.mxu0 %v635
    %670 = vmatprep.subr.mxu0 0.0
    %671 = vmatpush1.msra.mxu0 %v636
    %672 = vmatprep.subr.mxu0 0.0
    %673 = vmatpush1.msra.mxu0 %v637
    %674 = vmatprep.subr.mxu0 0.0
    %675 = vmatpush1.msra.mxu0 %v638
    %676 = vmatprep.subr.mxu0 0.0
    %677 = vmatpush1.msra.mxu0 %v639
    %678 = vmatprep.subr.mxu0 0.0
    %679 = vmatpush1.msra.mxu0 %v640
    %680 = vmatprep.subr.mxu0 0.0
    %681 = vmatpush1.msra.mxu0 0.0
    %682 = vmatprep.subr.mxu0 0.0
    %683 = vmatpush1.msra.mxu0 0.0
    %684 = vmatprep.subr.mxu0 0.0
    %685 = vmatpush1.msra.mxu0 0.0
    %686 = vmatprep.subr.mxu0 0.0
    %687 = vmatpush1.msra.mxu0 0.0
    %688 = vmatprep.subr.mxu0 0.0
    %689 = vmatpush1.msra.mxu0 0.0
    %690 = vmatprep.subr.mxu0 0.0
    %691 = vmatpush1.msra.mxu0 0.0
    %692 = vmatprep.subr.mxu0 0.0
    %693 = vmatpush1.msra.mxu0 0.0
    %694 = vmatprep.subr.mxu0 0.0
    %695 = vmatpush1.msra.mxu0 0.0
    %696 = vmatprep.subr.mxu0 0.0
    %697 = vmatpush1.msra.mxu0 0.0
    %698 = vmatprep.subr.mxu0 0.0
    %699 = vmatpush1.msra.mxu0 0.0
    %700 = vmatprep.subr.mxu0 0.0
    %701 = vmatpush1.msra.mxu0 0.0
    %702 = vmatprep.subr.mxu0 0.0
    %703 = vmatpush1.msra.mxu0 0.0
    %704 = vmatprep.subr.mxu0 0.0
    %705 = vmatpush1.msra.mxu0 0.0
    %706 = vmatprep.subr.mxu0 0.0
    %707 = vmatpush1.msra.mxu0 0.0
    %708 = vmatprep.subr.mxu0 0.0
    %709 = vmatpush1.msra.mxu0 0.0
    %710 = vmatprep.subr.mxu0 0.0
    %711 = vmatpush1.msra.mxu0 0.0
    %712 = vmatprep.mubr.f32.mxu0 0.0
    %713 = vmatmul.mubr.f32.gmra.mrb[0].mxu0 %v624
    %v714 = vpop.f32.mrb[0].mxu0
    %v715 = vadd.f32 %v646, %v714
    %v716 = vpop.f32.mrb[0].mxu0
    %717 = vdwg.mxu0
    %718 = vst [vmem:[#allocation11] sm:$0xff] %v715
    // Predicated region
    $region54: #{identity_forward.1} parent=1 // pred_check
      _
    $region55: #{identity_forward.1} parent=1 // pred_check_branch
      %720 = sbr.rel (0) target = $region57
    $region56: #{identity_forward.1} parent=1 // pred_region
      %s722 = ssub.s32 128, 32
      %723 = vsyncadd [#allocation5], %s722
      %s724 = sshll.u32 [#allocation11], 4
      %s725 = int_to_ptr.vmem [resolvable:$true] %s724
      %730 = dma.vmem_to_hbm [thread:$0]  %s725, 32, %s9, [#allocation5], 32, 32, 2
    $region57: #{identity_forward.1} parent=1 // pred_fallthru
      _
    // Predicated region
    $region58: #{identity_forward.1} parent=1 // pred_check
      _
    $region59: #{identity_forward.1} parent=1 // pred_check_branch
      %732 = sbr.rel (0) target = $region61
    $region60: #{identity_forward.1} parent=1 // pred_region
      %733 = dma.done [#allocation5], 128
    $region61: #{identity_forward.1} parent=1 // pred_fallthru
      _
    %734 = vsyncpa [#allocation4], 1
    %735 = vsyncpa [#allocation7], 1
    %736 = vsyncpa [#allocation10], 1
    %737 = vsyncpa [#allocation5], 1

</llo_original>
